<compile_context>
chip_gen: v6e
topology: v6e:2x2x1
jax: 0.10.0
libtpu: 0.0.40
codegen_flags: <defaults>
</compile_context>

<pallas_src>
import functools

import jax
import jax.numpy as jnp
from jax.experimental import pallas as pl
from jax.experimental.pallas import tpu as pltpu

_LANES = 128


def _round_up(x: int, m: int) -> int:
    return ((x + m - 1) // m) * m


# -----------------------------------------------------------------------------
# Kernel 1: scalar per-atom field (D == 1), lane-dense (rows, 128) layout.
# -----------------------------------------------------------------------------
def _seg_reduce_scalar_kernel(b_ref, x_ref, o_ref, acc_ref, cnt_ref, *,
                              num_frames, reduce, constant):
    step = pl.program_id(0)

    @pl.when(step == 0)
    def _init():
        acc_ref[...] = jnp.zeros_like(acc_ref)
        cnt_ref[...] = jnp.zeros_like(cnt_ref)

    b = b_ref[...]                                  # (tile_rows, 128) int32 frame ids
    x = x_ref[...].astype(jnp.float32)              # cast once, in-kernel

    # Per-frame masked partial sums kept lane-resident; the cross-lane reduction
    # happens exactly once, at the final grid step.
    row_sel = jax.lax.broadcasted_iota(jnp.int32, (num_frames, _LANES), 0)
    contrib = jnp.zeros((num_frames, _LANES), jnp.float32)
    cnt_contrib = jnp.zeros((num_frames, _LANES), jnp.float32)
    for f in range(num_frames):                     # num_frames is static
        m = b == f
        part = jnp.sum(jnp.where(m, x, 0.0), axis=0, keepdims=True)      # (1, 128)
        contrib = contrib + jnp.where(row_sel == f, part, 0.0)
        if reduce == "mean":
            cpart = jnp.sum(m.astype(jnp.float32), axis=0, keepdims=True)
            cnt_contrib = cnt_contrib + jnp.where(row_sel == f, cpart, 0.0)
    acc_ref[...] += contrib
    if reduce == "mean":
        cnt_ref[...] += cnt_contrib

    @pl.when(step == pl.num_programs(0) - 1)
    def _finalize():
        total = jnp.sum(acc_ref[...], axis=1, keepdims=True)             # (F, 1)
        if reduce == "mean":
            counts = jnp.sum(cnt_ref[...], axis=1, keepdims=True)
            total = total / jnp.maximum(counts, 1.0)
        if constant != 1.0:
            total = total * constant
        o_ref[...] = total.astype(o_ref.dtype)


def _reduce_scalar_field(field_1d, batch, num_frames, reduce, constant, tile_rows):
    n = field_1d.shape[0]
    rows_needed = max(1, _round_up(n, _LANES) // _LANES)
    tile_rows = max(8, min(tile_rows, _round_up(rows_needed, 8)))
    rows = _round_up(rows_needed, tile_rows)
    n_pad = rows * _LANES

    x2 = jnp.pad(field_1d, (0, n_pad - n)).reshape(rows, _LANES)
    # Padded atoms get an out-of-range frame id -> they never contribute.
    b2 = jnp.pad(batch, (0, n_pad - n),
                 constant_values=num_frames).reshape(rows, _LANES)

    grid = (rows // tile_rows,)
    kernel = functools.partial(_seg_reduce_scalar_kernel, num_frames=num_frames,
                               reduce=reduce, constant=constant)
    itemsize = jnp.dtype(field_1d.dtype).itemsize
    return pl.pallas_call(
        kernel,
        out_shape=jax.ShapeDtypeStruct((num_frames, 1), jnp.float32),
        grid_spec=pltpu.PrefetchScalarGridSpec(
            num_scalar_prefetch=0,
            grid=grid,
            in_specs=[
                pl.BlockSpec((tile_rows, _LANES), lambda i: (i, 0)),   # batch ids
                pl.BlockSpec((tile_rows, _LANES), lambda i: (i, 0)),   # field
            ],
            out_specs=pl.BlockSpec((num_frames, 1), lambda i: (0, 0)),
            scratch_shapes=[
                pltpu.VMEM((num_frames, _LANES), jnp.float32),         # per-lane sums
                pltpu.VMEM((num_frames, _LANES), jnp.float32),         # per-lane counts
            ],
        ),
        compiler_params=pltpu.CompilerParams(
            dimension_semantics=("arbitrary",),                        # reduction axis
        ),
        cost_estimate=pl.CostEstimate(
            flops=3 * n_pad * num_frames,
            transcendentals=0,
            bytes_accessed=n_pad * (itemsize + 4) + num_frames * 4,
        ),
    )(b2, x2)


# -----------------------------------------------------------------------------
# Kernel 2: vector per-atom field (D > 1), presented as (D, N) with atoms on lanes.
# -----------------------------------------------------------------------------
def _seg_reduce_vector_kernel(b_ref, xt_ref, o_ref, cnt_ref, *,
                              num_frames, reduce, constant):
    step = pl.program_id(0)

    @pl.when(step == 0)
    def _init():
        o_ref[...] = jnp.zeros_like(o_ref)
        cnt_ref[...] = jnp.zeros_like(cnt_ref)

    b_row = b_ref[...]                               # (1, tile_n) int32 frame ids
    xt = xt_ref[...].astype(jnp.float32)             # (D, tile_n)
    d = xt.shape[0]

    col_sel = jax.lax.broadcasted_iota(jnp.int32, (d, num_frames), 1)
    cnt_sel = jax.lax.broadcasted_iota(jnp.int32, (1, num_frames), 1)
    contrib = jnp.zeros((d, num_frames), jnp.float32)
    cnt_contrib = jnp.zeros((1, num_frames), jnp.float32)
    for f in range(num_frames):                      # num_frames is static
        m = b_row == f                                                    # (1, tile_n)
        part = jnp.sum(jnp.where(m, xt, 0.0), axis=1, keepdims=True)      # (D, 1)
        contrib = contrib + jnp.where(col_sel == f, part, 0.0)
        if reduce == "mean":
            cpart = jnp.sum(m.astype(jnp.float32), axis=1, keepdims=True)  # (1, 1)
            cnt_contrib = cnt_contrib + jnp.where(cnt_sel == f, cpart, 0.0)
    o_ref[...] += contrib
    if reduce == "mean":
        cnt_ref[...] += cnt_contrib

    @pl.when(step == pl.num_programs(0) - 1)
    def _finalize():
        res = o_ref[...]
        if reduce == "mean":
            res = res / jnp.maximum(cnt_ref[...], 1.0)
        if constant != 1.0:
            res = res * constant
        o_ref[...] = res


def _reduce_vector_field(field, batch, num_frames, reduce, constant, tile_atoms):
    n, d = field.shape
    tile_n = max(_LANES, min(_round_up(tile_atoms, _LANES), _round_up(n, _LANES)))
    n_pad = _round_up(n, tile_n)

    # Transpose is wrapper-side layout plumbing: atoms land on the lane axis.
    xt = jnp.pad(field, ((0, n_pad - n), (0, 0))).T                  # (D, n_pad)
    b_row = jnp.pad(batch, (0, n_pad - n),
                    constant_values=num_frames).reshape(1, n_pad)

    grid = (n_pad // tile_n,)
    kernel = functools.partial(_seg_reduce_vector_kernel, num_frames=num_frames,
                               reduce=reduce, constant=constant)
    itemsize = jnp.dtype(field.dtype).itemsize
    out_t = pl.pallas_call(
        kernel,
        out_shape=jax.ShapeDtypeStruct((d, num_frames), jnp.float32),
        grid_spec=pltpu.PrefetchScalarGridSpec(
            num_scalar_prefetch=0,
            grid=grid,
            in_specs=[
                pl.BlockSpec((1, tile_n), lambda i: (0, i)),          # batch ids
                pl.BlockSpec((d, tile_n), lambda i: (0, i)),          # field (D, N)
            ],
            out_specs=pl.BlockSpec((d, num_frames), lambda i: (0, 0)),
            scratch_shapes=[pltpu.VMEM((1, num_frames), jnp.float32)],
        ),
        compiler_params=pltpu.CompilerParams(
            dimension_semantics=("arbitrary",),
        ),
        cost_estimate=pl.CostEstimate(
            flops=3 * n_pad * d * num_frames,
            transcendentals=0,
            bytes_accessed=n_pad * (d * itemsize + 4) + num_frames * d * 4,
        ),
    )(b_row, xt)
    return out_t.T                                                   # (num_frames, D)


# -----------------------------------------------------------------------------
# Public wrapper == AtomwiseReduce.forward
# -----------------------------------------------------------------------------
def atomwise_reduce(field, batch=None, num_frames=None, *, reduce="sum",
                    avg_num_atoms=None, tile_rows=512, tile_atoms=2048):
    """Pallas implementation of AtomwiseReduce.forward.

    field:      (N, D) (or (N,)) per-atom field
    batch:      optional (N,) int frame index per atom
    num_frames: static python int (required when batch is given)
    reduce:     'sum' | 'mean' | 'normalized_sum'
    returns:    (num_frames, D) float32  (or (1, D) when batch is None)
    """
    assert reduce in ("sum", "mean", "normalized_sum")
    constant = 1.0
    if reduce == "normalized_sum":
        assert avg_num_atoms is not None
        constant = float(avg_num_atoms) ** (-0.5)
        reduce = "sum"

    field = jnp.asarray(field)
    if field.ndim == 1:
        field = field.reshape(-1, 1)
    n, d = field.shape

    if batch is None:
        batch = jnp.zeros((n,), dtype=jnp.int32)
        num_frames = 1
    assert num_frames is not None
    num_frames = int(num_frames)
    batch = jnp.asarray(batch, dtype=jnp.int32).reshape(n)

    if d == 1 and num_frames <= 64:
        return _reduce_scalar_field(field.reshape(n), batch, num_frames,
                                    reduce, constant, tile_rows)
    return _reduce_vector_field(field, batch, num_frames, reduce, constant, tile_atoms)


if __name__ == "__main__":
    key = jax.random.PRNGKey(0)
    k_e, k_f = jax.random.split(key)

    # Small synthetic batch of 3 molecular "frames" with 5, 7 and 4 atoms.
    frame_sizes = [5, 7, 4]
    num_frames = len(frame_sizes)
    n_atoms = sum(frame_sizes)
    batch = jnp.concatenate(
        [jnp.full((sz,), i, dtype=jnp.int32) for i, sz in enumerate(frame_sizes)])

    energies = jax.random.normal(k_e, (n_atoms, 1), dtype=jnp.float32)  # scalar field
    features = jax.random.normal(k_f, (n_atoms, 4), dtype=jnp.float32)  # vector field

    def ref_scatter(x, reduce, avg_num_atoms=None):
        seg = jax.ops.segment_sum(x, batch, num_segments=num_frames)
        if reduce == "mean":
            cnt = jax.ops.segment_sum(jnp.ones((n_atoms, 1), jnp.float32), batch,
                                      num_segments=num_frames)
            return seg / cnt
        if reduce == "normalized_sum":
            return seg * (float(avg_num_atoms) ** -0.5)
        return seg

    avg_n = n_atoms / num_frames
    checks = [
        (atomwise_reduce(energies, batch, num_frames, reduce="sum"),
         ref_scatter(energies, "sum")),
        (atomwise_reduce(energies, batch, num_frames, reduce="mean"),
         ref_scatter(energies, "mean")),
        (atomwise_reduce(energies, batch, num_frames, reduce="normalized_sum",
                         avg_num_atoms=avg_n),
         ref_scatter(energies, "normalized_sum", avg_num_atoms=avg_n)),
        (atomwise_reduce(features, batch, num_frames, reduce="sum"),
         ref_scatter(features, "sum")),
        # no-batch path: whole-system sum with keepdim
        (atomwise_reduce(energies, reduce="sum"),
         jnp.sum(energies, axis=0, keepdims=True)),
    ]

    for got, want in checks:
        got = jax.block_until_ready(got)
        assert got.shape == want.shape, (got.shape, want.shape)
        assert jnp.allclose(got, want, atol=1e-5, rtol=1e-5), (got, want)

    print("KERNEL_OK")
</pallas_src>

<mosaic_0001>
module attributes {stable_mosaic.version = 11 : i64} {
  func.func @_seg_reduce_scalar_kernel(%arg0: i32, %arg1: memref<8x128xi32, #tpu.memory_space<vmem>>, %arg2: memref<8x128xf32, #tpu.memory_space<vmem>>, %arg3: memref<3x1xf32, #tpu.memory_space<vmem>>, %arg4: memref<3x128xf32, #tpu.memory_space<vmem>>, %arg5: memref<3x128xf32, #tpu.memory_space<vmem>>) attributes {dimension_semantics = [#tpu.dimension_semantics<arbitrary>], iteration_bounds = array<i64: 1>, scalar_prefetch = 0 : i64, scratch_operands = 2 : i64, tpu.core_type = #tpu.core_type<tc>, window_params = [{transform_indices = @transform_0, window_bounds = array<i64: 8, 128>}, {transform_indices = @transform_1, window_bounds = array<i64: 8, 128>}, {pipeline_mode = #tpu.pipeline_mode<synchronous>, transform_indices = @transform_2, window_bounds = array<i64: 3, 1>}]} {
    %c0_i32 = arith.constant 0 : i32
    %0 = arith.cmpi eq, %arg0, %c0_i32 : i32
    %1 = arith.extui %0 : i1 to i32
    %c0_i32_0 = arith.constant 0 : i32
    %2 = arith.cmpi ne, %1, %c0_i32_0 : i32
    scf.if %2 {
      %cst_23 = arith.constant 0.000000e+00 : f32
      %52 = vector.broadcast %cst_23 : f32 to vector<3x128xf32>
      %c0_24 = arith.constant 0 : index
      %c0_25 = arith.constant 0 : index
      %53 = vector.load %arg4[%c0_24, %c0_25] : memref<3x128xf32, #tpu.memory_space<vmem>>, vector<3x128xf32>
      tpu.vector_store %arg4[%c0_24, %c0_25], %52 {strides = array<i32>} : memref<3x128xf32, #tpu.memory_space<vmem>>, vector<3x128xf32>,
      %cst_26 = arith.constant 0.000000e+00 : f32
      %54 = vector.broadcast %cst_26 : f32 to vector<3x128xf32>
      %c0_27 = arith.constant 0 : index
      %c0_28 = arith.constant 0 : index
      %55 = vector.load %arg5[%c0_27, %c0_28] : memref<3x128xf32, #tpu.memory_space<vmem>>, vector<3x128xf32>
      tpu.vector_store %arg5[%c0_27, %c0_28], %54 {strides = array<i32>} : memref<3x128xf32, #tpu.memory_space<vmem>>, vector<3x128xf32>,
    } else {
    }
    %c0 = arith.constant 0 : index
    %c0_1 = arith.constant 0 : index
    %3 = vector.load %arg1[%c0, %c0_1] : memref<8x128xi32, #tpu.memory_space<vmem>>, vector<8x128xi32>
    %c0_2 = arith.constant 0 : index
    %c0_3 = arith.constant 0 : index
    %4 = vector.load %arg2[%c0_2, %c0_3] : memref<8x128xf32, #tpu.memory_space<vmem>>, vector<8x128xf32>
    %5 = tpu.iota {dimensions = array<i32: 0>} : vector<3x128xi32>
    %cst = arith.constant 0.000000e+00 : f32
    %6 = vector.broadcast %cst : f32 to vector<3x128xf32>
    %c0_i32_4 = arith.constant 0 : i32
    %7 = vector.broadcast %c0_i32_4 : i32 to vector<8x128xi32>
    %8 = arith.cmpi eq, %3, %7 : vector<8x128xi32>
    %cst_5 = arith.constant 0.000000e+00 : f32
    %9 = vector.broadcast %cst_5 : f32 to vector<8x128xf32>
    %10 = arith.select %8, %4, %9 : vector<8x128xi1>, vector<8x128xf32>
    %cst_6 = arith.constant dense<0.000000e+00> : vector<128xf32>
    %11 = vector.multi_reduction <add>, %10, %cst_6 [0] : vector<8x128xf32> to vector<128xf32>
    %12 = vector.shape_cast %11 : vector<128xf32> to vector<1x128xf32>
    %c0_i32_7 = arith.constant 0 : i32
    %13 = vector.broadcast %c0_i32_7 : i32 to vector<3x128xi32>
    %14 = arith.cmpi eq, %5, %13 : vector<3x128xi32>
    %cst_8 = arith.constant 0.000000e+00 : f32
    %15 = vector.shape_cast %12 : vector<1x128xf32> to vector<1x128xf32>
    %16 = vector.broadcast %15 : vector<1x128xf32> to vector<3x128xf32>
    %17 = vector.broadcast %cst_8 : f32 to vector<3x128xf32>
    %18 = arith.select %14, %16, %17 : vector<3x128xi1>, vector<3x128xf32>
    %19 = arith.addf %6, %18 : vector<3x128xf32>
    %c1_i32 = arith.constant 1 : i32
    %20 = vector.broadcast %c1_i32 : i32 to vector<8x128xi32>
    %21 = arith.cmpi eq, %3, %20 : vector<8x128xi32>
    %cst_9 = arith.constant 0.000000e+00 : f32
    %22 = vector.broadcast %cst_9 : f32 to vector<8x128xf32>
    %23 = arith.select %21, %4, %22 : vector<8x128xi1>, vector<8x128xf32>
    %cst_10 = arith.constant dense<0.000000e+00> : vector<128xf32>
    %24 = vector.multi_reduction <add>, %23, %cst_10 [0] : vector<8x128xf32> to vector<128xf32>
    %25 = vector.shape_cast %24 : vector<128xf32> to vector<1x128xf32>
    %c1_i32_11 = arith.constant 1 : i32
    %26 = vector.broadcast %c1_i32_11 : i32 to vector<3x128xi32>
    %27 = arith.cmpi eq, %5, %26 : vector<3x128xi32>
    %cst_12 = arith.constant 0.000000e+00 : f32
    %28 = vector.shape_cast %25 : vector<1x128xf32> to vector<1x128xf32>
    %29 = vector.broadcast %28 : vector<1x128xf32> to vector<3x128xf32>
    %30 = vector.broadcast %cst_12 : f32 to vector<3x128xf32>
    %31 = arith.select %27, %29, %30 : vector<3x128xi1>, vector<3x128xf32>
    %32 = arith.addf %19, %31 : vector<3x128xf32>
    %c2_i32 = arith.constant 2 : i32
    %33 = vector.broadcast %c2_i32 : i32 to vector<8x128xi32>
    %34 = arith.cmpi eq, %3, %33 : vector<8x128xi32>
    %cst_13 = arith.constant 0.000000e+00 : f32
    %35 = vector.broadcast %cst_13 : f32 to vector<8x128xf32>
    %36 = arith.select %34, %4, %35 : vector<8x128xi1>, vector<8x128xf32>
    %cst_14 = arith.constant dense<0.000000e+00> : vector<128xf32>
    %37 = vector.multi_reduction <add>, %36, %cst_14 [0] : vector<8x128xf32> to vector<128xf32>
    %38 = vector.shape_cast %37 : vector<128xf32> to vector<1x128xf32>
    %c2_i32_15 = arith.constant 2 : i32
    %39 = vector.broadcast %c2_i32_15 : i32 to vector<3x128xi32>
    %40 = arith.cmpi eq, %5, %39 : vector<3x128xi32>
    %cst_16 = arith.constant 0.000000e+00 : f32
    %41 = vector.shape_cast %38 : vector<1x128xf32> to vector<1x128xf32>
    %42 = vector.broadcast %41 : vector<1x128xf32> to vector<3x128xf32>
    %43 = vector.broadcast %cst_16 : f32 to vector<3x128xf32>
    %44 = arith.select %40, %42, %43 : vector<3x128xi1>, vector<3x128xf32>
    %45 = arith.addf %32, %44 : vector<3x128xf32>
    %c0_17 = arith.constant 0 : index
    %c0_18 = arith.constant 0 : index
    %46 = vector.load %arg4[%c0_17, %c0_18] : memref<3x128xf32, #tpu.memory_space<vmem>>, vector<3x128xf32>
    %47 = arith.addf %46, %45 : vector<3x128xf32>
    %c0_19 = arith.constant 0 : index
    %c0_20 = arith.constant 0 : index
    %48 = vector.load %arg4[%c0_19, %c0_20] : memref<3x128xf32, #tpu.memory_space<vmem>>, vector<3x128xf32>
    tpu.vector_store %arg4[%c0_19, %c0_20], %47 {strides = array<i32>} : memref<3x128xf32, #tpu.memory_space<vmem>>, vector<3x128xf32>,
    %c0_i32_21 = arith.constant 0 : i32
    %49 = arith.cmpi eq, %arg0, %c0_i32_21 : i32
    %50 = arith.extui %49 : i1 to i32
    %c0_i32_22 = arith.constant 0 : i32
    %51 = arith.cmpi ne, %50, %c0_i32_22 : i32
    scf.if %51 {
      %c0_23 = arith.constant 0 : index
      %c0_24 = arith.constant 0 : index
      %52 = vector.load %arg4[%c0_23, %c0_24] : memref<3x128xf32, #tpu.memory_space<vmem>>, vector<3x128xf32>
      %cst_25 = arith.constant dense<0.000000e+00> : vector<3xf32>
      %53 = vector.multi_reduction <add>, %52, %cst_25 [1] : vector<3x128xf32> to vector<3xf32>
      %54 = vector.shape_cast %53 : vector<3xf32> to vector<3x1xf32>
      %c0_26 = arith.constant 0 : index
      %c0_27 = arith.constant 0 : index
      %55 = vector.load %arg3[%c0_26, %c0_27] : memref<3x1xf32, #tpu.memory_space<vmem>>, vector<3x1xf32>
      tpu.vector_store %arg3[%c0_26, %c0_27], %54 {strides = array<i32>} : memref<3x1xf32, #tpu.memory_space<vmem>>, vector<3x1xf32>,
    } else {
    }
    return
  }
  func.func @transform_0(%arg0: i32) -> (i32, i32) {
    %c0_i32 = arith.constant 0 : i32
    %c0_i32_0 = arith.constant 0 : i32
    return %arg0, %c0_i32 : i32, i32
  }
  func.func @transform_1(%arg0: i32) -> (i32, i32) {
    %c0_i32 = arith.constant 0 : i32
    %c0_i32_0 = arith.constant 0 : i32
    return %arg0, %c0_i32 : i32, i32
  }
  func.func @transform_2(%arg0: i32) -> (i32, i32) {
    %c0_i32 = arith.constant 0 : i32
    %c0_i32_0 = arith.constant 0 : i32
    %c0_i32_1 = arith.constant 0 : i32
    return %c0_i32, %c0_i32_0 : i32, i32
  }
}

</mosaic_0001>

<llo_original>
// kernel: tpu_custom_call.1
$region0: #{tpu_custom_call.1}
  #allocation0 [shape = 'u32[]', space=smem, size = 0x4, offset = 0x4, fixed_abs, tag = 'smem constant byte address 0x4 - core index']
  #allocation1 [shape = 'u32[144,128]{1,0:T(1,128)}', space=vmem, size = 0x12000, scoped, tag = 'internal scratch']
  #allocation2 [shape = 'f32[3,128]{1,0:T(4,128)}', space=vmem, size = 0x800, scoped, tag = 'scratch operand']
  #allocation3 [shape = 'f32[3,128]{1,0:T(4,128)}', space=vmem, size = 0x800, scoped, tag = 'scratch operand']
  %s0 = inlined_call_operand.hbm [shape: s32[8,128], index: 0, kind: input, shape index: {}]
  %s1 = inlined_call_operand.hbm [shape: f32[8,128], index: 1, kind: input, shape index: {}]
  %s2 = inlined_call_operand.vmem [shape: f32[3,1], index: 2, kind: output, shape index: {}]
  %s3 = sld [smem:[#allocation0]]
  $region34: #{tpu_custom_call.1} parent=0
    _
  %s5 = ssub.s32 1, %s3
  %s6 = scalar_select 0, %s5, %s3
  $region1: #{tpu_custom_call.1} parent=0
    #allocation4 [shape = 'u8[4096]{0}', space=vmem, size = 0x1000, scoped, tag = 'input window, operand 0, single buffered']
    #allocation5 [shape = 's32[1]{0}', space=sflag, size = 0x4, scoped, tag = 'scoped memory for tpu_custom_call.1']
    #allocation6 [shape = 'u8[4096]{0}', space=vmem, size = 0x1000, scoped, tag = 'input window, operand 1, single buffered']
    #allocation7 [shape = 's32[1]{0}', space=sflag, size = 0x4, scoped, tag = 'scoped memory for tpu_custom_call.1']
    %7 = vsyncpa [#allocation5], 0
    %8 = vsyncpa [#allocation7], 0
    // Predicated region
    $region2: #{tpu_custom_call.1} parent=1 // pred_check
      _
    $region3: #{tpu_custom_call.1} parent=1 // pred_check_branch
      %10 = sbr.rel (0) target = $region5
    $region4: #{tpu_custom_call.1} parent=1 // pred_region
      %s12 = ssub.s32 128, 128
      %13 = vsyncadd [#allocation5], %s12
      %s15 = sshll.u32 [#allocation4], 4
      %s16 = int_to_ptr.vmem [resolvable:$true] %s15
      %18 = dma.hbm_to_vmem [thread:$0]  %s0, 128, %s16, [#allocation5]
    $region5: #{tpu_custom_call.1} parent=1 // pred_fallthru
      _
    // Predicated region
    $region6: #{tpu_custom_call.1} parent=1 // pred_check
      _
    $region7: #{tpu_custom_call.1} parent=1 // pred_check_branch
      %20 = sbr.rel (0) target = $region9
    $region8: #{tpu_custom_call.1} parent=1 // pred_region
      %s22 = ssub.s32 128, 128
      %23 = vsyncadd [#allocation7], %s22
      %s25 = sshll.u32 [#allocation6], 4
      %s26 = int_to_ptr.vmem [resolvable:$true] %s25
      %28 = dma.hbm_to_vmem [thread:$0]  %s1, 128, %s26, [#allocation7]
    $region9: #{tpu_custom_call.1} parent=1 // pred_fallthru
      _
    // Predicated region
    $region10: #{tpu_custom_call.1} parent=1 // pred_check
      _
    $region11: #{tpu_custom_call.1} parent=1 // pred_check_branch
      %30 = sbr.rel (0) target = $region13
    $region12: #{tpu_custom_call.1} parent=1 // pred_region
      %31 = dma.done [#allocation5], 128
    $region13: #{tpu_custom_call.1} parent=1 // pred_fallthru
      _
    // Predicated region
    $region14: #{tpu_custom_call.1} parent=1 // pred_check
      _
    $region15: #{tpu_custom_call.1} parent=1 // pred_check_branch
      %33 = sbr.rel (0) target = $region17
    $region16: #{tpu_custom_call.1} parent=1 // pred_region
      %34 = dma.done [#allocation7], 128
    $region17: #{tpu_custom_call.1} parent=1 // pred_fallthru
      _
    %p35 = scmp.eq.s32.totalorder 0, 0
    // Predicated region
    $region18: #{tpu_custom_call.1} parent=1 // pred_check
      %p36 = pneg %p35
    $region19: #{tpu_custom_call.1} parent=1 // pred_check_branch
      %38 = sbr.rel (%p36) target = $region21
    $region20: #{tpu_custom_call.1} parent=1 // pred_region
      %39 = vst [vmem:[#allocation2] sm:$0x7] 0.0
      %40 = vst [vmem:[#allocation3] sm:$0x7] 0.0
    $region21: #{tpu_custom_call.1} parent=1 // pred_fallthru
      _
    %v41 = vld [vmem:[#allocation4] sm:$0xff]
    %v42 = vld [vmem:[#allocation6] sm:$0xff]
    %v43 = vlaneseq
    %v44 = vshrl.u32 %v43, 7
    %vm45 = vcmp.eq.s32.totalorder %v41, 0
    %v46 = vsel %vm45, %v42, 0.0
    %v47 = vrot.slane %v46, 4
    %v48 = vadd.f32 %v46, %v47
    %v49 = vrot.slane %v48, 2
    %v50 = vadd.f32 %v48, %v49
    %v51 = vrot.slane %v50, 1
    %v52 = vadd.f32 %v50, %v51
    %vm53 = vcmp.eq.s32.totalorder %v44, 0
    %v54 = vsel %vm53, %v52, 0.0
    %v55 = vadd.f32 %v54, 0.0
    %vm56 = vcmp.eq.s32.totalorder %v41, 1
    %v57 = vsel %vm56, %v42, 0.0
    %v58 = vrot.slane %v57, 4
    %v59 = vadd.f32 %v57, %v58
    %v60 = vrot.slane %v59, 2
    %v61 = vadd.f32 %v59, %v60
    %v62 = vrot.slane %v61, 1
    %v63 = vadd.f32 %v61, %v62
    %vm64 = vcmp.eq.s32.totalorder %v44, 1
    %v65 = vsel %vm64, %v63, 0.0
    %v66 = vadd.f32 %v55, %v65
    %vm67 = vcmp.eq.s32.totalorder %v41, 2
    %v68 = vsel %vm67, %v42, 0.0
    %v69 = vrot.slane %v68, 4
    %v70 = vadd.f32 %v68, %v69
    %v71 = vrot.slane %v70, 2
    %v72 = vadd.f32 %v70, %v71
    %v73 = vrot.slane %v72, 1
    %v74 = vadd.f32 %v72, %v73
    %vm75 = vcmp.eq.s32.totalorder %v44, 2
    %v76 = vsel %vm75, %v74, 0.0
    %v77 = vadd.f32 %v66, %v76
    %v78 = vld [vmem:[#allocation2] sm:$0x7]
    %v79 = vadd.f32 %v78, %v77
    %80 = vst [vmem:[#allocation2] sm:$0x7] %v79
    // Predicated region
    $region22: #{tpu_custom_call.1} parent=1 // pred_check
      %p81 = pneg %p35
    $region23: #{tpu_custom_call.1} parent=1 // pred_check_branch
      %83 = sbr.rel (%p81) target = $region25
    $region24: #{tpu_custom_call.1} parent=1 // pred_region
      %v84 = vld [vmem:[#allocation2] sm:$0x7]
      %vm85 = vcmask 1042432
      %v86 = vsel %vm85, %v84, 0.0
      %87 = vadd.xlane.f32.xlu0 %v86
      %v88 = vpop.xlane.xlu0 %87
      %vm89 = vcmask 2048
      %90 = vst.msk [vmem:[%s2] sm:$0x7] %vm89, %v88
    $region25: #{tpu_custom_call.1} parent=1 // pred_fallthru
      _
    // Predicated region
    $region26: #{tpu_custom_call.1} parent=1 // pred_check
      _
    $region27: #{tpu_custom_call.1} parent=1 // pred_check_branch
      %92 = sbr.rel (0) target = $region29
    $region28: #{tpu_custom_call.1} parent=1 // pred_region
      _
    $region29: #{tpu_custom_call.1} parent=1 // pred_fallthru
      _
    // Predicated region
    $region30: #{tpu_custom_call.1} parent=1 // pred_check
      _
    $region31: #{tpu_custom_call.1} parent=1 // pred_check_branch
      %94 = sbr.rel (0) target = $region33
    $region32: #{tpu_custom_call.1} parent=1 // pred_region
      _
    $region33: #{tpu_custom_call.1} parent=1 // pred_fallthru
      _
    %95 = vsyncpa [#allocation5], 1
    %96 = vsyncpa [#allocation7], 1

</llo_original>
